<compile_context>
chip_gen: v6e
topology: v6e:2x2x1
jax: 0.10.0
libtpu: 0.0.40
codegen_flags: <defaults>
</compile_context>

<pallas_src>
import math

import jax
import jax.numpy as jnp
import numpy as np
from jax.experimental import pallas as pl
from jax.experimental.pallas import tpu as pltpu


# ---------------------------------------------------------------------------
# Shared gate math (f32, full-width EUP activations + lane-mask select).
# ---------------------------------------------------------------------------
def _lstm_gate_math(gates, c_prev, H):
    # gates: (rows, 4H) f32; c_prev: (rows, H) f32
    sig = jax.nn.sigmoid(gates)                       # full-width EUP pass
    tnh = jnp.tanh(gates)                             # full-width EUP pass
    lane = jax.lax.broadcasted_iota(jnp.int32, gates.shape, dimension=1)
    is_cell = (lane >= 2 * H) & (lane < 3 * H)
    acts = jnp.where(is_cell, tnh, sig)               # single full-width select
    ingate = acts[:, 0 * H:1 * H]
    forgetgate = acts[:, 1 * H:2 * H]
    cellgate = acts[:, 2 * H:3 * H]
    outgate = acts[:, 3 * H:4 * H]
    c_new = c_prev * forgetgate + ingate * cellgate
    h_new = outgate * jnp.tanh(c_new)
    return h_new, c_new


# ---------------------------------------------------------------------------
# Single-step kernel (LSTMCell.forward semantics).
# ---------------------------------------------------------------------------
def lstm_cell_kernel(x_ref, hx_ref, cx_ref, wxT_ref, whT_ref, b_ref,
                     hy_ref, cy_ref):
    H = cx_ref.shape[-1]
    x_bf = x_ref[...].astype(jnp.bfloat16)
    h_bf = hx_ref[...].astype(jnp.bfloat16)

    # Two MXU pushes into the same f32 accumulator (x2h + h2h), then bias.
    gates = jnp.dot(x_bf, wxT_ref[...], preferred_element_type=jnp.float32)
    gates = gates + jnp.dot(h_bf, whT_ref[...],
                            preferred_element_type=jnp.float32)
    gates = gates + b_ref[...]

    h_new, c_new = _lstm_gate_math(gates, cx_ref[...].astype(jnp.float32), H)
    hy_ref[...] = h_new.astype(hy_ref.dtype)
    cy_ref[...] = c_new.astype(cy_ref.dtype)


def prepare_lstm_params(wx, wh, bx, bh, compute_dtype=jnp.bfloat16):
    """One-time parameter prep (hoisted out of the per-call path).

    wx: (4H, I), wh: (4H, H) in PyTorch (out, in) layout; bx, bh: (4H,).
    Returns (wxT, whT, b) with the weights transposed + cast to the MXU dtype
    and the two biases pre-summed in f32.
    """
    wxT = jnp.asarray(wx.T, dtype=compute_dtype)        # (I, 4H)
    whT = jnp.asarray(wh.T, dtype=compute_dtype)        # (H, 4H)
    b = (bx.astype(jnp.float32) + bh.astype(jnp.float32)).reshape(1, -1)
    return wxT, whT, b


def _batch_tile(B):
    if B <= 8:
        return B  # block == full array dim (always a legal block shape)
    # >= 2 grid steps so megacore (v7x) / pipelining have work to split;
    # multiple of 8 sublanes; capped at 256 rows per tile.
    tb = ((B + 1) // 2 + 7) // 8 * 8
    return max(8, min(256, tb))


def lstm_cell(x, hx, cx, params):
    """Pallas LSTMCell forward (one step).  Returns (hy, cy).

    x: (B, I); hx, cx: (B, H); params from prepare_lstm_params().
    """
    wxT, whT, b = params
    B, I = x.shape
    H = hx.shape[-1]
    TB = _batch_tile(B)
    grid = (pl.cdiv(B, TB),)

    cost = pl.CostEstimate(
        flops=2 * B * (I + H) * 4 * H,
        transcendentals=9 * B * H,  # 2 full-width EUP passes + tanh(cy)
        bytes_accessed=(4 * B * (I + 2 * H)        # x, hx, cx (f32)
                        + 2 * (I + H) * 4 * H      # bf16 weights
                        + 4 * 4 * H                # fused bias
                        + 4 * 2 * B * H),          # hy, cy
    )

    hy, cy = pl.pallas_call(
        lstm_cell_kernel,
        out_shape=(
            jax.ShapeDtypeStruct((B, H), x.dtype),
            jax.ShapeDtypeStruct((B, H), x.dtype),
        ),
        grid_spec=pltpu.PrefetchScalarGridSpec(
            num_scalar_prefetch=0,
            grid=grid,
            in_specs=[
                pl.BlockSpec((TB, I), lambda n: (n, 0)),
                pl.BlockSpec((TB, H), lambda n: (n, 0)),
                pl.BlockSpec((TB, H), lambda n: (n, 0)),
                pl.BlockSpec((I, 4 * H), lambda n: (0, 0)),   # resident weight
                pl.BlockSpec((H, 4 * H), lambda n: (0, 0)),   # resident weight
                pl.BlockSpec((1, 4 * H), lambda n: (0, 0)),
            ],
            out_specs=[
                pl.BlockSpec((TB, H), lambda n: (n, 0)),
                pl.BlockSpec((TB, H), lambda n: (n, 0)),
            ],
        ),
        compiler_params=pltpu.CompilerParams(
            dimension_semantics=("parallel",)),
        cost_estimate=cost,
    )(x, hx, cx, wxT, whT, b)
    return hy, cy


# ---------------------------------------------------------------------------
# Fused time-loop kernel: whole recurrence in one pallas_call, grid=(T,).
# x2h (+ bias) for all timesteps is precomputed as one big matmul outside;
# Wh^T stays resident in VMEM and h/c carry across steps in VMEM scratch.
# ---------------------------------------------------------------------------
def lstm_seq_kernel(gx_ref, whT_ref, h0_ref, c0_ref,
                    hseq_ref, hT_ref, cT_ref, h_sc, c_sc):
    t = pl.program_id(0)
    H = h0_ref.shape[-1]

    @pl.when(t == 0)
    def _():
        h_sc[...] = h0_ref[...].astype(jnp.float32)
        c_sc[...] = c0_ref[...].astype(jnp.float32)

    h_prev = h_sc[...]
    c_prev = c_sc[...]

    gates = gx_ref[0] + jnp.dot(h_prev.astype(jnp.bfloat16), whT_ref[...],
                                preferred_element_type=jnp.float32)
    h_new, c_new = _lstm_gate_math(gates, c_prev, H)

    h_sc[...] = h_new
    c_sc[...] = c_new
    hseq_ref[0] = h_new.astype(hseq_ref.dtype)

    @pl.when(t == pl.num_programs(0) - 1)
    def _():
        hT_ref[...] = h_new.astype(hT_ref.dtype)
        cT_ref[...] = c_new.astype(cT_ref.dtype)


def lstm_sequence(x_seq, h0, c0, params):
    """Run the LSTMCell over a whole sequence in one pallas_call.

    x_seq: (T, B, I); h0, c0: (B, H).  Returns (h_seq (T,B,H), h_T, c_T).
    """
    wxT, whT, b = params
    T, B, I = x_seq.shape
    H = h0.shape[-1]

    # One MXU-efficient (T*B, 4H) matmul for every timestep's x2h, with both
    # biases folded in (gx already includes bx + bh).
    gx = (jnp.dot(x_seq.reshape(T * B, I).astype(jnp.bfloat16), wxT,
                  preferred_element_type=jnp.float32) + b
          ).reshape(T, B, 4 * H)

    h_seq, h_T, c_T = pl.pallas_call(
        lstm_seq_kernel,
        out_shape=(
            jax.ShapeDtypeStruct((T, B, H), x_seq.dtype),
            jax.ShapeDtypeStruct((B, H), x_seq.dtype),
            jax.ShapeDtypeStruct((B, H), x_seq.dtype),
        ),
        grid_spec=pltpu.PrefetchScalarGridSpec(
            num_scalar_prefetch=0,
            grid=(T,),
            in_specs=[
                pl.BlockSpec((1, B, 4 * H), lambda t: (t, 0, 0)),  # per-step gx
                pl.BlockSpec((H, 4 * H), lambda t: (0, 0)),        # resident Wh^T
                pl.BlockSpec((B, H), lambda t: (0, 0)),
                pl.BlockSpec((B, H), lambda t: (0, 0)),
            ],
            out_specs=[
                pl.BlockSpec((1, B, H), lambda t: (t, 0, 0)),
                pl.BlockSpec((B, H), lambda t: (0, 0)),            # final h
                pl.BlockSpec((B, H), lambda t: (0, 0)),            # final c
            ],
            scratch_shapes=[
                pltpu.VMEM((B, H), jnp.float32),   # h carried across steps
                pltpu.VMEM((B, H), jnp.float32),   # c carried across steps
            ],
        ),
        compiler_params=pltpu.CompilerParams(
            dimension_semantics=("arbitrary",)),   # sequential recurrence
    )(gx, whT, h0, c0)
    return h_seq, h_T, c_T


# ---------------------------------------------------------------------------
# Pure-JAX reference (mirrors the PyTorch forward exactly, f32).
# ---------------------------------------------------------------------------
def lstm_cell_ref(x, hx, cx, wx, wh, bx, bh):
    gates = x @ wx.T + bx + hx @ wh.T + bh
    i, f, g, o = jnp.split(gates, 4, axis=1)
    i = jax.nn.sigmoid(i)
    f = jax.nn.sigmoid(f)
    g = jnp.tanh(g)
    o = jax.nn.sigmoid(o)
    cy = cx * f + i * g
    hy = o * jnp.tanh(cy)
    return hy, cy


if __name__ == "__main__":
    # Shapes consistent with LSTMCell(input_size=32, hidden_size=32):
    # 4*H = 128 gates -> lane-dense matmul output.  Short sequence T=8.
    B, I, H, T = 2, 32, 32, 8
    std = 1.0 / math.sqrt(H)

    key = jax.random.PRNGKey(0)
    kx, kh, kc, kwx, kwh, kbx, kbh, kxs = jax.random.split(key, 8)
    x = jax.random.normal(kx, (B, I), dtype=jnp.float32)
    hx = jax.random.normal(kh, (B, H), dtype=jnp.float32)
    cx = jax.random.normal(kc, (B, H), dtype=jnp.float32)
    # reset_parameters(): uniform(-std, std) on all weights/biases.
    wx = jax.random.uniform(kwx, (4 * H, I), jnp.float32, -std, std)
    wh = jax.random.uniform(kwh, (4 * H, H), jnp.float32, -std, std)
    bx = jax.random.uniform(kbx, (4 * H,), jnp.float32, -std, std)
    bh = jax.random.uniform(kbh, (4 * H,), jnp.float32, -std, std)

    # One-time parameter prep (transpose + bf16 cast + bias fuse), NOT per call.
    params = prepare_lstm_params(wx, wh, bx, bh)

    # --- single step (exact LSTMCell.forward semantics) ---
    hy, cy = jax.block_until_ready(lstm_cell(x, hx, cx, params))
    hy_r, cy_r = lstm_cell_ref(x, hx, cx, wx, wh, bx, bh)
    # bf16 MXU operands with f32 accumulation/elementwise: looser tolerance.
    np.testing.assert_allclose(np.asarray(hy), np.asarray(hy_r), rtol=2e-2, atol=2e-2)
    np.testing.assert_allclose(np.asarray(cy), np.asarray(cy_r), rtol=2e-2, atol=2e-2)

    # --- fused time loop (typical usage; single pallas_call over T steps) ---
    x_seq = jax.random.normal(kxs, (T, B, I), dtype=jnp.float32)
    h_seq, h_T, c_T = jax.block_until_ready(lstm_sequence(x_seq, hx, cx, params))

    h_r, c_r = hx, cx
    h_seq_r = []
    for t in range(T):
        h_r, c_r = lstm_cell_ref(x_seq[t], h_r, c_r, wx, wh, bx, bh)
        h_seq_r.append(h_r)
    h_seq_r = jnp.stack(h_seq_r)
    np.testing.assert_allclose(np.asarray(h_seq), np.asarray(h_seq_r), rtol=5e-2, atol=5e-2)
    np.testing.assert_allclose(np.asarray(h_T), np.asarray(h_r), rtol=5e-2, atol=5e-2)
    np.testing.assert_allclose(np.asarray(c_T), np.asarray(c_r), rtol=5e-2, atol=5e-2)

    print("KERNEL_OK")
</pallas_src>

<mosaic_0001>
module attributes {stable_mosaic.version = 11 : i64} {
  func.func @lstm_cell_kernel(%arg0: i32, %arg1: memref<2x32xf32, #tpu.memory_space<vmem>>, %arg2: memref<2x32xf32, #tpu.memory_space<vmem>>, %arg3: memref<2x32xf32, #tpu.memory_space<vmem>>, %arg4: memref<32x128xbf16, #tpu.memory_space<vmem>>, %arg5: memref<32x128xbf16, #tpu.memory_space<vmem>>, %arg6: memref<1x128xf32, #tpu.memory_space<vmem>>, %arg7: memref<2x32xf32, #tpu.memory_space<vmem>>, %arg8: memref<2x32xf32, #tpu.memory_space<vmem>>) attributes {dimension_semantics = [#tpu.dimension_semantics<parallel>], iteration_bounds = array<i64: 1>, scalar_prefetch = 0 : i64, scratch_operands = 0 : i64, tpu.core_type = #tpu.core_type<tc>, window_params = [{transform_indices = @transform_0, window_bounds = array<i64: 2, 32>}, {transform_indices = @transform_1, window_bounds = array<i64: 2, 32>}, {transform_indices = @transform_2, window_bounds = array<i64: 2, 32>}, {pipeline_mode = #tpu.pipeline_mode<synchronous>, transform_indices = @transform_3, window_bounds = array<i64: 32, 128>}, {pipeline_mode = #tpu.pipeline_mode<synchronous>, transform_indices = @transform_4, window_bounds = array<i64: 32, 128>}, {pipeline_mode = #tpu.pipeline_mode<synchronous>, transform_indices = @transform_5, window_bounds = array<i64: 1, 128>}, {transform_indices = @transform_6, window_bounds = array<i64: 2, 32>}, {transform_indices = @transform_7, window_bounds = array<i64: 2, 32>}]} {
    %c0 = arith.constant 0 : index
    %c0_0 = arith.constant 0 : index
    %0 = vector.load %arg1[%c0, %c0_0] : memref<2x32xf32, #tpu.memory_space<vmem>>, vector<2x32xf32>
    %1 = arith.truncf %0 : vector<2x32xf32> to vector<2x32xbf16>
    %c0_1 = arith.constant 0 : index
    %c0_2 = arith.constant 0 : index
    %2 = vector.load %arg2[%c0_1, %c0_2] : memref<2x32xf32, #tpu.memory_space<vmem>>, vector<2x32xf32>
    %3 = arith.truncf %2 : vector<2x32xf32> to vector<2x32xbf16>
    %c0_3 = arith.constant 0 : index
    %c0_4 = arith.constant 0 : index
    %4 = vector.load %arg4[%c0_3, %c0_4] : memref<32x128xbf16, #tpu.memory_space<vmem>>, vector<32x128xbf16>
    %cst = arith.constant dense<0.000000e+00> : vector<2x128xf32>
    %5 = tpu.matmul %1, %4, %cst {dimension_numbers = #tpu.dot_dimension_numbers<[1], [0], [0], [1], [0, 0, 1, 1], [], []>} : vector<2x32xbf16>, vector<32x128xbf16>, vector<2x128xf32> -> vector<2x128xf32>
    %c0_5 = arith.constant 0 : index
    %c0_6 = arith.constant 0 : index
    %6 = vector.load %arg5[%c0_5, %c0_6] : memref<32x128xbf16, #tpu.memory_space<vmem>>, vector<32x128xbf16>
    %cst_7 = arith.constant dense<0.000000e+00> : vector<2x128xf32>
    %7 = tpu.matmul %3, %6, %cst_7 {dimension_numbers = #tpu.dot_dimension_numbers<[1], [0], [0], [1], [0, 0, 1, 1], [], []>} : vector<2x32xbf16>, vector<32x128xbf16>, vector<2x128xf32> -> vector<2x128xf32>
    %8 = arith.addf %5, %7 : vector<2x128xf32>
    %c0_8 = arith.constant 0 : index
    %c0_9 = arith.constant 0 : index
    %9 = vector.load %arg6[%c0_8, %c0_9] : memref<1x128xf32, #tpu.memory_space<vmem>>, vector<1x128xf32>
    %10 = vector.broadcast %9 : vector<1x128xf32> to vector<2x128xf32>
    %11 = arith.addf %8, %10 : vector<2x128xf32>
    %c0_10 = arith.constant 0 : index
    %c0_11 = arith.constant 0 : index
    %12 = vector.load %arg3[%c0_10, %c0_11] : memref<2x32xf32, #tpu.memory_space<vmem>>, vector<2x32xf32>
    %13 = arith.negf %11 : vector<2x128xf32>
    %14 = math.exp %13 : vector<2x128xf32>
    %cst_12 = arith.constant 1.000000e+00 : f32
    %15 = vector.broadcast %cst_12 : f32 to vector<2x128xf32>
    %16 = arith.addf %15, %14 : vector<2x128xf32>
    %17 = arith.divf %15, %16 : vector<2x128xf32>
    %18 = math.tanh %11 : vector<2x128xf32>
    %19 = tpu.iota {dimensions = array<i32: 1>} : vector<2x128xi32>
    %c64_i32 = arith.constant 64 : i32
    %20 = vector.broadcast %c64_i32 : i32 to vector<2x128xi32>
    %21 = arith.cmpi sge, %19, %20 : vector<2x128xi32>
    %c96_i32 = arith.constant 96 : i32
    %22 = vector.broadcast %c96_i32 : i32 to vector<2x128xi32>
    %23 = arith.cmpi slt, %19, %22 : vector<2x128xi32>
    %24 = arith.andi %21, %23 : vector<2x128xi1>
    %25 = arith.select %24, %18, %17 : vector<2x128xi1>, vector<2x128xf32>
    %26 = vector.extract_strided_slice %25 {offsets = [0, 0], sizes = [2, 32], strides = [1, 1]} : vector<2x128xf32> to vector<2x32xf32>
    %27 = vector.extract_strided_slice %25 {offsets = [0, 32], sizes = [2, 32], strides = [1, 1]} : vector<2x128xf32> to vector<2x32xf32>
    %28 = vector.extract_strided_slice %25 {offsets = [0, 64], sizes = [2, 32], strides = [1, 1]} : vector<2x128xf32> to vector<2x32xf32>
    %29 = vector.extract_strided_slice %25 {offsets = [0, 96], sizes = [2, 32], strides = [1, 1]} : vector<2x128xf32> to vector<2x32xf32>
    %30 = arith.mulf %12, %27 : vector<2x32xf32>
    %31 = arith.mulf %26, %28 : vector<2x32xf32>
    %32 = arith.addf %30, %31 : vector<2x32xf32>
    %33 = math.tanh %32 : vector<2x32xf32>
    %34 = arith.mulf %29, %33 : vector<2x32xf32>
    %c0_13 = arith.constant 0 : index
    %c0_14 = arith.constant 0 : index
    %35 = vector.load %arg7[%c0_13, %c0_14] : memref<2x32xf32, #tpu.memory_space<vmem>>, vector<2x32xf32>
    tpu.vector_store %arg7[%c0_13, %c0_14], %34 {strides = array<i32>} : memref<2x32xf32, #tpu.memory_space<vmem>>, vector<2x32xf32>,
    %c0_15 = arith.constant 0 : index
    %c0_16 = arith.constant 0 : index
    %36 = vector.load %arg8[%c0_15, %c0_16] : memref<2x32xf32, #tpu.memory_space<vmem>>, vector<2x32xf32>
    tpu.vector_store %arg8[%c0_15, %c0_16], %32 {strides = array<i32>} : memref<2x32xf32, #tpu.memory_space<vmem>>, vector<2x32xf32>,
    return
  }
  func.func @transform_0(%arg0: i32) -> (i32, i32) {
    %c0_i32 = arith.constant 0 : i32
    %c0_i32_0 = arith.constant 0 : i32
    return %arg0, %c0_i32 : i32, i32
  }
  func.func @transform_1(%arg0: i32) -> (i32, i32) {
    %c0_i32 = arith.constant 0 : i32
    %c0_i32_0 = arith.constant 0 : i32
    return %arg0, %c0_i32 : i32, i32
  }
  func.func @transform_2(%arg0: i32) -> (i32, i32) {
    %c0_i32 = arith.constant 0 : i32
    %c0_i32_0 = arith.constant 0 : i32
    return %arg0, %c0_i32 : i32, i32
  }
  func.func @transform_3(%arg0: i32) -> (i32, i32) {
    %c0_i32 = arith.constant 0 : i32
    %c0_i32_0 = arith.constant 0 : i32
    %c0_i32_1 = arith.constant 0 : i32
    return %c0_i32, %c0_i32_0 : i32, i32
  }
  func.func @transform_4(%arg0: i32) -> (i32, i32) {
    %c0_i32 = arith.constant 0 : i32
    %c0_i32_0 = arith.constant 0 : i32
    %c0_i32_1 = arith.constant 0 : i32
    return %c0_i32, %c0_i32_0 : i32, i32
  }
  func.func @transform_5(%arg0: i32) -> (i32, i32) {
    %c0_i32 = arith.constant 0 : i32
    %c0_i32_0 = arith.constant 0 : i32
    %c0_i32_1 = arith.constant 0 : i32
    return %c0_i32, %c0_i32_0 : i32, i32
  }
  func.func @transform_6(%arg0: i32) -> (i32, i32) {
    %c0_i32 = arith.constant 0 : i32
    %c0_i32_0 = arith.constant 0 : i32
    return %arg0, %c0_i32 : i32, i32
  }
  func.func @transform_7(%arg0: i32) -> (i32, i32) {
    %c0_i32 = arith.constant 0 : i32
    %c0_i32_0 = arith.constant 0 : i32
    return %arg0, %c0_i32 : i32, i32
  }
}

</mosaic_0001>

<llo_original>
// kernel: tpu_custom_call.1
$region0: #{tpu_custom_call.1}
  #allocation0 [shape = 'u32[]', space=smem, size = 0x4, offset = 0x4, fixed_abs, tag = 'smem constant byte address 0x4 - core index']
  #allocation1 [shape = 'u32[144,128]{1,0:T(1,128)}', space=vmem, size = 0x12000, scoped, tag = 'internal scratch']
  %s0 = inlined_call_operand.hbm [shape: f32[2,32], index: 0, kind: input, shape index: {}]
  %s1 = inlined_call_operand.hbm [shape: f32[2,32], index: 1, kind: input, shape index: {}]
  %s2 = inlined_call_operand.vmem [shape: f32[2,32], index: 2, kind: input, shape index: {}]
  %s3 = inlined_call_operand.hbm [shape: bf16[32,128], index: 3, kind: input, shape index: {}]
  %s4 = inlined_call_operand.hbm [shape: bf16[32,128], index: 4, kind: input, shape index: {}]
  %s5 = inlined_call_operand.vmem [shape: f32[1,128], index: 5, kind: input, shape index: {}]
  %s6 = inlined_call_operand.hbm [shape: f32[2,32], index: 6, kind: output, shape index: {0}]
  %s7 = inlined_call_operand.hbm [shape: f32[2,32], index: 7, kind: output, shape index: {1}]
  %8 = xla_tuple %s6, %s7
  %s9 = sld [smem:[#allocation0]]
  $region58: #{tpu_custom_call.1} parent=0
    _
  %s11 = ssub.s32 1, %s9
  %s12 = scalar_select 0, %s11, %s9
  $region1: #{tpu_custom_call.1} parent=0
    #allocation2 [shape = 'u8[1024]{0}', space=vmem, size = 0x400, scoped, tag = 'input window, operand 0, single buffered']
    #allocation3 [shape = 's32[1]{0}', space=sflag, size = 0x4, scoped, tag = 'scoped memory for tpu_custom_call.1']
    #allocation4 [shape = 's32[1]{0}', space=sflag, size = 0x4, scoped, tag = 'scoped memory for tpu_custom_call.1']
    #allocation5 [shape = 'u8[1024]{0}', space=vmem, size = 0x400, scoped, tag = 'input window, operand 1, single buffered']
    #allocation6 [shape = 's32[1]{0}', space=sflag, size = 0x4, scoped, tag = 'scoped memory for tpu_custom_call.1']
    #allocation7 [shape = 'u8[8192]{0}', space=vmem, size = 0x2000, scoped, tag = 'input window, operand 3, single buffered']
    #allocation8 [shape = 'u8[8192]{0}', space=vmem, size = 0x2000, scoped, tag = 'input window, operand 4, single buffered']
    #allocation9 [shape = 's32[1]{0}', space=sflag, size = 0x4, scoped, tag = 'scoped memory for tpu_custom_call.1']
    #allocation10 [shape = 'u8[1024]{0}', space=vmem, size = 0x400, scoped, tag = 'output window, operand 0, single buffered']
    #allocation11 [shape = 'u8[1024]{0}', space=vmem, size = 0x400, scoped, tag = 'output window, operand 1, single buffered']
    #allocation12 [shape = 's32[1]{0}', space=sflag, size = 0x4, scoped, tag = 'scoped memory for tpu_custom_call.1']
    %13 = vsyncpa [#allocation3], 0
    %14 = vsyncpa [#allocation6], 0
    %15 = vsyncpa [#allocation9], 0
    %16 = vsyncpa [#allocation4], 0
    %17 = vsyncpa [#allocation12], 0
    // Predicated region
    $region2: #{tpu_custom_call.1} parent=1 // pred_check
      _
    $region3: #{tpu_custom_call.1} parent=1 // pred_check_branch
      %19 = sbr.rel (0) target = $region5
    $region4: #{tpu_custom_call.1} parent=1 // pred_region
      %s21 = ssub.s32 32, 32
      %22 = vsyncadd [#allocation3], %s21
      %s24 = sshll.u32 [#allocation2], 4
      %s25 = int_to_ptr.vmem [resolvable:$true] %s24
      %27 = dma.hbm_to_vmem [thread:$0]  %s0, 32, %s25, [#allocation3]
    $region5: #{tpu_custom_call.1} parent=1 // pred_fallthru
      _
    // Predicated region
    $region6: #{tpu_custom_call.1} parent=1 // pred_check
      _
    $region7: #{tpu_custom_call.1} parent=1 // pred_check_branch
      %29 = sbr.rel (0) target = $region9
    $region8: #{tpu_custom_call.1} parent=1 // pred_region
      %s31 = ssub.s32 32, 32
      %32 = vsyncadd [#allocation6], %s31
      %s34 = sshll.u32 [#allocation5], 4
      %s35 = int_to_ptr.vmem [resolvable:$true] %s34
      %37 = dma.hbm_to_vmem [thread:$0]  %s1, 32, %s35, [#allocation6]
    $region9: #{tpu_custom_call.1} parent=1 // pred_fallthru
      _
    // Predicated region
    $region10: #{tpu_custom_call.1} parent=1 // pred_check
      _
    $region11: #{tpu_custom_call.1} parent=1 // pred_check_branch
      %39 = sbr.rel (0) target = $region13
    $region12: #{tpu_custom_call.1} parent=1 // pred_region
      _
    $region13: #{tpu_custom_call.1} parent=1 // pred_fallthru
      _
    // Predicated region
    $region14: #{tpu_custom_call.1} parent=1 // pred_check
      _
    $region15: #{tpu_custom_call.1} parent=1 // pred_check_branch
      %41 = sbr.rel (0) target = $region17
    $region16: #{tpu_custom_call.1} parent=1 // pred_region
      %s43 = ssub.s32 256, 256
      %44 = vsyncadd [#allocation6], %s43
      %s45 = sshll.u32 [#allocation7], 4
      %s46 = int_to_ptr.vmem [resolvable:$true] %s45
      %51 = dma.hbm_to_vmem [thread:$0]  %s3, 256, %s46, [#allocation6], 64, 64, 4
    $region17: #{tpu_custom_call.1} parent=1 // pred_fallthru
      _
    // Predicated region
    $region18: #{tpu_custom_call.1} parent=1 // pred_check
      _
    $region19: #{tpu_custom_call.1} parent=1 // pred_check_branch
      %53 = sbr.rel (0) target = $region21
    $region20: #{tpu_custom_call.1} parent=1 // pred_region
      %s55 = ssub.s32 256, 256
      %56 = vsyncadd [#allocation9], %s55
      %s57 = sshll.u32 [#allocation8], 4
      %s58 = int_to_ptr.vmem [resolvable:$true] %s57
      %63 = dma.hbm_to_vmem [thread:$0]  %s4, 256, %s58, [#allocation9], 64, 64, 4
    $region21: #{tpu_custom_call.1} parent=1 // pred_fallthru
      _
    // Predicated region
    $region22: #{tpu_custom_call.1} parent=1 // pred_check
      _
    $region23: #{tpu_custom_call.1} parent=1 // pred_check_branch
      %65 = sbr.rel (0) target = $region25
    $region24: #{tpu_custom_call.1} parent=1 // pred_region
      _
    $region25: #{tpu_custom_call.1} parent=1 // pred_fallthru
      _
    // Predicated region
    $region26: #{tpu_custom_call.1} parent=1 // pred_check
      _
    $region27: #{tpu_custom_call.1} parent=1 // pred_check_branch
      %67 = sbr.rel (0) target = $region29
    $region28: #{tpu_custom_call.1} parent=1 // pred_region
      %68 = dma.done [#allocation3], 32
    $region29: #{tpu_custom_call.1} parent=1 // pred_fallthru
      _
    // Predicated region
    $region30: #{tpu_custom_call.1} parent=1 // pred_check
      _
    $region31: #{tpu_custom_call.1} parent=1 // pred_check_branch
      %70 = sbr.rel (0) target = $region33
    $region32: #{tpu_custom_call.1} parent=1 // pred_region
      %71 = dma.done [#allocation6], 32
    $region33: #{tpu_custom_call.1} parent=1 // pred_fallthru
      _
    // Predicated region
    $region34: #{tpu_custom_call.1} parent=1 // pred_check
      _
    $region35: #{tpu_custom_call.1} parent=1 // pred_check_branch
      %73 = sbr.rel (0) target = $region37
    $region36: #{tpu_custom_call.1} parent=1 // pred_region
      %74 = dma.done [#allocation6], 256
    $region37: #{tpu_custom_call.1} parent=1 // pred_fallthru
      _
    // Predicated region
    $region38: #{tpu_custom_call.1} parent=1 // pred_check
      _
    $region39: #{tpu_custom_call.1} parent=1 // pred_check_branch
      %76 = sbr.rel (0) target = $region41
    $region40: #{tpu_custom_call.1} parent=1 // pred_region
      %77 = dma.done [#allocation9], 256
    $region41: #{tpu_custom_call.1} parent=1 // pred_fallthru
      _
    %v79 = vld [vmem:[#allocation2] sm:$0x3]
    %v80 = vpack.c.bf16 %v79, %v79
    %v81 = vld [vmem:[#allocation5] sm:$0x3]
    %v82 = vpack.c.bf16 %v81, %v81
    %v83 = vld [vmem:[#allocation7] sm:$0xf]
    %v84 = vld [vmem:[#allocation7 + $0x4] sm:$0xf]
    %v85 = vld [vmem:[#allocation7 + $0x8] sm:$0xf]
    %v86 = vld [vmem:[#allocation7 + $0xc] sm:$0xf]
    %v87 = vld [vmem:[#allocation8] sm:$0xf]
    %v88 = vld [vmem:[#allocation8 + $0x4] sm:$0xf]
    %v89 = vld [vmem:[#allocation8 + $0x8] sm:$0xf]
    %v90 = vld [vmem:[#allocation8 + $0xc] sm:$0xf]
    %v95 = vunpack.c.l.b16 %v87
    %v96 = vunpack.c.l.b16 %v88
    %v97 = vunpack.c.l.b16 %v89
    %v98 = vunpack.c.l.b16 %v90
    %v99 = vpack.c.b16 %v96, %v95
    %v100 = vpack.c.b16 %v98, %v97
    %vm103 = vcmask 261120
    %v105 = vsel %vm103, %v82, 0
    %107 = vmatprep.subr.bf16.mxu0 0
    %108 = vmatpush1.bf16.msra.mxu0 0
    %109 = vmatprep.subr.bf16.mxu0 0
    %110 = vmatpush1.bf16.msra.mxu0 0
    %111 = vmatprep.subr.bf16.mxu0 0
    %112 = vmatpush1.bf16.msra.mxu0 0
    %113 = vmatprep.subr.bf16.mxu0 0
    %114 = vmatpush1.bf16.msra.mxu0 0
    %115 = vmatprep.subr.bf16.mxu0 0
    %116 = vmatpush1.bf16.msra.mxu0 0
    %117 = vmatprep.subr.bf16.mxu0 0
    %118 = vmatpush1.bf16.msra.mxu0 0
    %119 = vmatprep.subr.bf16.mxu0 0
    %120 = vmatpush1.bf16.msra.mxu0 %v100
    %121 = vmatprep.subr.bf16.mxu0 0
    %122 = vmatpush1.bf16.msra.mxu0 %v99
    %123 = vmatprep.subr.bf16.mxu0 0
    %124 = vmatpush2.bf16.msra.mxu0 0
    %125 = vmatprep.subr.bf16.mxu0 0
    %126 = vmatpush2.bf16.msra.mxu0 0
    %127 = vmatprep.subr.bf16.mxu0 0
    %128 = vmatpush2.bf16.msra.mxu0 0
    %129 = vmatprep.subr.bf16.mxu0 0
    %130 = vmatpush2.bf16.msra.mxu0 0
    %131 = vmatprep.subr.bf16.mxu0 0
    %132 = vmatpush2.bf16.msra.mxu0 0
    %133 = vmatprep.subr.bf16.mxu0 0
    %134 = vmatpush2.bf16.msra.mxu0 0
    %135 = vmatprep.subr.bf16.mxu0 0
    %136 = vmatpush2.bf16.msra.mxu0 0
    %137 = vmatprep.subr.bf16.mxu0 0
    %138 = vmatpush2.bf16.msra.mxu0 0
    %139 = vmatprep.mubr.bf16.mxu0 0
    %140 = vmatmul.mubr.bf16.gmra.mxu0 %v105
    %v141 = vpop.f32.mrf.mxu0
    %v142 = vadd.f32 0.0, %v141
    %v143 = vpop.f32.mrf.mxu0
    %v144 = vpop.f32.mrf.mxu0
    %v145 = vpop.f32.mrf.mxu0
    %146 = vdwg.mxu0
    %v151 = vunpack.c.l.b16 %v83
    %v152 = vunpack.c.l.b16 %v84
    %v153 = vunpack.c.l.b16 %v85
    %v154 = vunpack.c.l.b16 %v86
    %v155 = vpack.c.b16 %v152, %v151
    %v156 = vpack.c.b16 %v154, %v153
    %v160 = vsel %vm103, %v80, 0
    %162 = vmatprep.subr.bf16.mxu0 0
    %163 = vmatpush1.bf16.msra.mxu0 0
    %164 = vmatprep.subr.bf16.mxu0 0
    %165 = vmatpush1.bf16.msra.mxu0 0
    %166 = vmatprep.subr.bf16.mxu0 0
    %167 = vmatpush1.bf16.msra.mxu0 0
    %168 = vmatprep.subr.bf16.mxu0 0
    %169 = vmatpush1.bf16.msra.mxu0 0
    %170 = vmatprep.subr.bf16.mxu0 0
    %171 = vmatpush1.bf16.msra.mxu0 0
    %172 = vmatprep.subr.bf16.mxu0 0
    %173 = vmatpush1.bf16.msra.mxu0 0
    %174 = vmatprep.subr.bf16.mxu0 0
    %175 = vmatpush1.bf16.msra.mxu0 %v156
    %176 = vmatprep.subr.bf16.mxu0 0
    %177 = vmatpush1.bf16.msra.mxu0 %v155
    %178 = vmatprep.subr.bf16.mxu0 0
    %179 = vmatpush2.bf16.msra.mxu0 0
    %180 = vmatprep.subr.bf16.mxu0 0
    %181 = vmatpush2.bf16.msra.mxu0 0
    %182 = vmatprep.subr.bf16.mxu0 0
    %183 = vmatpush2.bf16.msra.mxu0 0
    %184 = vmatprep.subr.bf16.mxu0 0
    %185 = vmatpush2.bf16.msra.mxu0 0
    %186 = vmatprep.subr.bf16.mxu0 0
    %187 = vmatpush2.bf16.msra.mxu0 0
    %188 = vmatprep.subr.bf16.mxu0 0
    %189 = vmatpush2.bf16.msra.mxu0 0
    %190 = vmatprep.subr.bf16.mxu0 0
    %191 = vmatpush2.bf16.msra.mxu0 0
    %192 = vmatprep.subr.bf16.mxu0 0
    %193 = vmatpush2.bf16.msra.mxu0 0
    %194 = vmatprep.mubr.bf16.mxu0 0
    %195 = vmatmul.mubr.bf16.gmra.mxu0 %v160
    %v196 = vpop.f32.mrf.mxu0
    %v197 = vadd.f32 %v142, %v196
    %v198 = vpop.f32.mrf.mxu0
    %v199 = vpop.f32.mrf.mxu0
    %v200 = vpop.f32.mrf.mxu0
    %201 = vdwg.mxu0
    %v202 = vld [vmem:[%s5] sm:$0x1]
    %v204 = vlaneseq
    %v205 = vshrl.u32 %v204, 7
    %v206 = vsub.s32 0, %v205
    %v207 = vrot.slane %v202, %v206
    %v209 = vadd.f32 %v197, %v207
    %v210 = vld [vmem:[%s2] sm:$0x3]
    %v211 = vxor.u32 %v209, 2147483648
    %v212 = vmul.f32 %v211, 1.442695
    %v213 = vpow.pop %v212
    %v214 = vadd.f32 %v213, 1.0
    %v215 = vrcp.pop %v214
    %v216 = vmul.f32 1.0, %v215
    %v217 = vtanh.pop %v209
    %v218 = vlaneseq
    %v219 = vand.u32 %v218, 127
    %vm220 = vcmp.ge.s32.totalorder %v219, 64
    %vm221 = vcmp.lt.s32.totalorder %v219, 96
    %vm222 = vmand %vm220, %vm221
    %v223 = vsel %vm222, %v217, %v216
    %225 = vrot.lane.b32.xlu0 %v223, 96
    %v226 = vpop.permute.xlu0 %225
    %v228 = vmul.f32 %v210, %v226
    %229 = vrot.lane.b32.xlu0 %v223, 64
    %v230 = vpop.permute.xlu0 %229
    %v232 = vmul.f32 %v223, %v230
    %v233 = vadd.f32 %v228, %v232
    %v234 = vtanh.pop %v233
    %236 = vrot.lane.b32.xlu0 %v234, 96
    %v237 = vpop.permute.xlu0 %236
    %v239 = vmul.f32 %v223, %v237
    %241 = vrot.lane.b32.xlu0 %v239, 32
    %v242 = vpop.permute.xlu0 %241
    %vm244 = vcmask 254976
    %245 = vst.msk [vmem:[#allocation10] sm:$0x3] %vm244, %v242
    %246 = vst.msk [vmem:[#allocation11] sm:$0x3] %vm244, %v233
    // Predicated region
    $region42: #{tpu_custom_call.1} parent=1 // pred_check
      _
    $region43: #{tpu_custom_call.1} parent=1 // pred_check_branch
      %248 = sbr.rel (0) target = $region45
    $region44: #{tpu_custom_call.1} parent=1 // pred_region
      %s250 = ssub.s32 32, 32
      %251 = vsyncadd [#allocation4], %s250
      %s253 = sshll.u32 [#allocation10], 4
      %s254 = int_to_ptr.vmem [resolvable:$true] %s253
      %256 = dma.vmem_to_hbm [thread:$0]  %s254, 32, %s6, [#allocation4]
    $region45: #{tpu_custom_call.1} parent=1 // pred_fallthru
      _
    // Predicated region
    $region46: #{tpu_custom_call.1} parent=1 // pred_check
      _
    $region47: #{tpu_custom_call.1} parent=1 // pred_check_branch
      %258 = sbr.rel (0) target = $region49
    $region48: #{tpu_custom_call.1} parent=1 // pred_region
      %s260 = ssub.s32 32, 32
      %261 = vsyncadd [#allocation12], %s260
      %s263 = sshll.u32 [#allocation11], 4
      %s264 = int_to_ptr.vmem [resolvable:$true] %s263
      %266 = dma.vmem_to_hbm [thread:$0]  %s264, 32, %s7, [#allocation12]
    $region49: #{tpu_custom_call.1} parent=1 // pred_fallthru
      _
    // Predicated region
    $region50: #{tpu_custom_call.1} parent=1 // pred_check
      _
    $region51: #{tpu_custom_call.1} parent=1 // pred_check_branch
      %268 = sbr.rel (0) target = $region53
    $region52: #{tpu_custom_call.1} parent=1 // pred_region
      %269 = dma.done [#allocation4], 32
    $region53: #{tpu_custom_call.1} parent=1 // pred_fallthru
      _
    // Predicated region
    $region54: #{tpu_custom_call.1} parent=1 // pred_check
      _
    $region55: #{tpu_custom_call.1} parent=1 // pred_check_branch
      %271 = sbr.rel (0) target = $region57
    $region56: #{tpu_custom_call.1} parent=1 // pred_region
      %272 = dma.done [#allocation12], 32
    $region57: #{tpu_custom_call.1} parent=1 // pred_fallthru
      _
    %273 = vsyncpa [#allocation3], 1
    %274 = vsyncpa [#allocation6], 1
    %275 = vsyncpa [#allocation9], 1
    %276 = vsyncpa [#allocation4], 1
    %277 = vsyncpa [#allocation12], 1

</llo_original>
